<compile_context>
chip_gen: v7x
topology: tpu7x:2x2x1
jax: 0.10.0
libtpu: 0.0.40
codegen_flags: <defaults>
</compile_context>

<pallas_src>
import functools
import math

import jax
import jax.numpy as jnp
from jax import lax
from jax.experimental import pallas as pl
from jax.experimental.pallas import tpu as pltpu


_BINS = 256
_MIN = 0.0
_MAX = 255.0
_R_TILE = 8       # rows (histograms) per grid step; multiple of 8 sublanes
_EXP_CAP = 30.0   # cap on exp argument so (1+t)*(1+t*k) never overflows f32


def _emd_hist_kernel(x_ref, o_ref, *, c0, c1, scale, k, exp_cap, bins):
    """Normalized soft histograms of clamp(x, 0, 1)*255 for a block of rows.

    x_ref : (R_TILE, L, 1)  raw input values, one column vector per row
    o_ref : (R_TILE, bins)  normalized soft histogram per row (lane-dense)
    """
    # Prescaled "upper bin edges"  bandwidth*(center + delta/2), generated once per
    # grid step from a 2-D iota and hoisted out of the row loop.  Exact in f32 for
    # the default (bins=256, max=255) configuration.
    ca = c0 + c1 * lax.broadcasted_iota(jnp.int32, (1, bins), 1).astype(jnp.float32)
    n_rows = o_ref.shape[0]

    def row_body(r, carry):
        xcol = x_ref[r]                                    # (L, 1)
        s = jnp.clip(xcol, 0.0, 1.0) * scale               # clamp(0,1)*255*bandwidth
        e = jnp.minimum(ca - s, exp_cap)                   # (L, bins)
        t = jnp.exp(e)                                     # single EUP exp / element
        denom = (1.0 + t) * (1.0 + t * k)
        r0 = pl.reciprocal(denom, approx=True)             # EUP vrcp (approx)
        rcp = r0 * (2.0 - denom * r0)                      # one Newton step -> ~f32
        w = t * rcp        # == (sig(b(d+dlt/2)) - sig(b(d-dlt/2))) / (1-k)
        h = jnp.sum(w, axis=0, keepdims=True)              # (1, bins)
        total = jnp.sum(h, axis=1, keepdims=True)          # (1, 1)
        ti = pl.reciprocal(total, approx=True)             # per-row normalization
        ti = ti * (2.0 - total * ti)                       # (1-k) cancels here
        o_ref[pl.ds(r, 1), :] = h * ti
        return carry

    lax.fori_loop(0, n_rows, row_body, 0)


def _emd_histograms(rows, *, bins=_BINS, vmin=_MIN, vmax=_MAX, bandwidth=1.0,
                    r_tile=_R_TILE):
    """rows: (R, L) float32 raw values. Returns (R, bins) normalized soft
    histograms of clamp(rows, 0, 1) * 255 (= EarthMoveDistance preprocessing +
    SoftHistogram.forward3D, flattened over (bs, c))."""
    R, L = rows.shape
    delta = (float(vmax) - float(vmin)) / float(bins)
    # ca_b = bandwidth * (vmin + delta*(b+0.5) + delta/2) = c0 + c1*b
    c1 = float(bandwidth) * delta
    c0 = float(bandwidth) * (float(vmin) + delta)
    k = math.exp(-float(bandwidth) * delta)
    scale = 255.0 * float(bandwidth)

    r_pad = ((R + r_tile - 1) // r_tile) * r_tile
    if r_pad != R:
        rows = jnp.pad(rows, ((0, r_pad - R), (0, 0)))
    x_col = rows.astype(jnp.float32).reshape(r_pad, L, 1)

    kernel = functools.partial(_emd_hist_kernel, c0=c0, c1=c1, scale=scale, k=k,
                               exp_cap=_EXP_CAP, bins=bins)
    out = pl.pallas_call(
        kernel,
        out_shape=jax.ShapeDtypeStruct((r_pad, bins), jnp.float32),
        grid_spec=pltpu.PrefetchScalarGridSpec(
            num_scalar_prefetch=0,
            grid=(r_pad // r_tile,),
            in_specs=[pl.BlockSpec((r_tile, L, 1), lambda g: (g, 0, 0))],
            out_specs=pl.BlockSpec((r_tile, bins), lambda g: (g, 0)),
        ),
        compiler_params=pltpu.CompilerParams(
            dimension_semantics=("parallel",)),
    )(x_col)
    return out[:R]


def earth_move_distance(x, y, *, bins=_BINS, bandwidth=1.0):
    """Pallas implementation of EarthMoveDistance.forward; x, y: (bs, c, H, W)."""
    bs, c = x.shape[0], x.shape[1]
    L = x.shape[2] * x.shape[3]
    rows = jnp.concatenate(
        [x.reshape(bs * c, L), y.reshape(bs * c, L)], axis=0).astype(jnp.float32)
    hists = _emd_histograms(rows, bins=bins, bandwidth=bandwidth)
    hist_x = hists[: bs * c]
    hist_y = hists[bs * c:]
    # TODO(synk): cumsum / squared-CDF-diff / mean epilogue is O(bs*c*bins) and is
    # kept in plain JAX rather than a second Pallas kernel.
    cdf_x = jnp.cumsum(hist_x, axis=-1)
    cdf_y = jnp.cumsum(hist_y, axis=-1)
    dist = jnp.sum((cdf_x - cdf_y) ** 2, axis=-1)          # sum over bins per row
    return jnp.mean(dist)


def _reference_emd(x, y, *, bins=_BINS, _min=_MIN, _max=_MAX, bandwidth=1.0):
    """Pure-JAX replica of the PyTorch EarthMoveDistance forward."""
    delta = (float(_max) - float(_min)) / float(bins)
    centers = float(_min) + delta * (jnp.arange(bins, dtype=jnp.float32) + 0.5)

    def soft_hist3d(v):                                     # v: (bs, c, L)
        d = v[:, :, None, :] - centers[None, None, :, None]
        w = (jax.nn.sigmoid(bandwidth * (d + delta / 2))
             - jax.nn.sigmoid(bandwidth * (d - delta / 2)))
        h = jnp.sum(w, axis=-1)
        return h / jnp.sum(h, axis=-1, keepdims=True)

    bs, c = x.shape[0], x.shape[1]
    ex = (jnp.clip(x, 0.0, 1.0) * 255.0).reshape(bs, c, -1)
    ey = (jnp.clip(y, 0.0, 1.0) * 255.0).reshape(bs, c, -1)
    cdf_x = jnp.cumsum(soft_hist3d(ex), axis=-1)
    cdf_y = jnp.cumsum(soft_hist3d(ey), axis=-1)
    return jnp.mean(jnp.sum((cdf_x - cdf_y) ** 2, axis=-1))


if __name__ == "__main__":
    key = jax.random.PRNGKey(0)
    kx, ky = jax.random.split(key)
    bs, c, hgt, wid = 2, 4, 16, 16
    # nominally [0, 1] images with a little spill so the clamp path is exercised
    x = jax.random.uniform(kx, (bs, c, hgt, wid), dtype=jnp.float32) * 1.2 - 0.1
    y = jax.random.uniform(ky, (bs, c, hgt, wid), dtype=jnp.float32) * 1.2 - 0.1

    out = earth_move_distance(x, y)
    out = jax.block_until_ready(out)

    ref = _reference_emd(x, y)
    assert out.shape == (), out.shape
    assert jnp.allclose(out, ref, rtol=2e-3, atol=1e-5), (float(out), float(ref))

    # Also check the Pallas histograms directly against the two-sigmoid reference.
    rows = jnp.concatenate(
        [x.reshape(bs * c, -1), y.reshape(bs * c, -1)], axis=0)
    hists = jax.block_until_ready(_emd_histograms(rows))
    delta = (_MAX - _MIN) / _BINS
    centers = _MIN + delta * (jnp.arange(_BINS, dtype=jnp.float32) + 0.5)
    v = jnp.clip(rows, 0.0, 1.0) * 255.0
    d = v[:, None, :] - centers[None, :, None]
    w = (jax.nn.sigmoid(1.0 * (d + delta / 2)) - jax.nn.sigmoid(1.0 * (d - delta / 2)))
    href = jnp.sum(w, axis=-1)
    href = href / jnp.sum(href, axis=-1, keepdims=True)
    assert jnp.allclose(hists, href, atol=2e-5, rtol=1e-3), float(
        jnp.max(jnp.abs(hists - href)))

    print("KERNEL_OK")
</pallas_src>

<mosaic_0001>
module attributes {stable_mosaic.version = 11 : i64} {
  func.func @_emd_hist_kernel(%arg0: i32, %arg1: memref<8x256x1xf32, #tpu.memory_space<vmem>>, %arg2: memref<8x256xf32, #tpu.memory_space<vmem>>) attributes {dimension_semantics = [#tpu.dimension_semantics<parallel>], iteration_bounds = array<i64: 2>, scalar_prefetch = 0 : i64, scratch_operands = 0 : i64, tpu.core_type = #tpu.core_type<tc>, window_params = [{transform_indices = @transform_0, window_bounds = array<i64: 8, 256, 1>}, {transform_indices = @transform_1, window_bounds = array<i64: 8, 256>}]} {
    %0 = tpu.iota {dimensions = array<i32: 1>} : vector<1x256xi32>
    %1 = arith.sitofp %0 : vector<1x256xi32> to vector<1x256xf32>
    %cst = arith.constant 0.99609375 : f32
    %2 = vector.broadcast %cst : f32 to vector<1x256xf32>
    %3 = arith.mulf %2, %1 : vector<1x256xf32>
    %cst_0 = arith.constant 0.99609375 : f32
    %4 = vector.broadcast %cst_0 : f32 to vector<1x256xf32>
    %5 = arith.addf %4, %3 : vector<1x256xf32>
    %c0_i32 = arith.constant 0 : i32
    %c8_i32 = arith.constant 8 : i32
    %6 = arith.addi %c0_i32, %c8_i32 : i32
    %c1_i32 = arith.constant 1 : i32
    scf.for %arg3 = %c0_i32 to %6 step %c1_i32  : i32 {
      %7 = arith.index_cast %arg3 : i32 to index
      %c0 = arith.constant 0 : index
      %c0_2 = arith.constant 0 : index
      %8 = vector.load %arg1[%7, %c0, %c0_2] : memref<8x256x1xf32, #tpu.memory_space<vmem>>, vector<1x256x1xf32>
      %9 = vector.shape_cast %8 : vector<1x256x1xf32> to vector<256x1xf32>
      %cst_3 = arith.constant 0.000000e+00 : f32
      %cst_4 = arith.constant 1.000000e+00 : f32
      %10 = vector.broadcast %cst_3 : f32 to vector<256x1xf32>
      %11 = arith.maximumf %10, %9 : vector<256x1xf32>
      %12 = vector.broadcast %cst_4 : f32 to vector<256x1xf32>
      %13 = arith.minimumf %12, %11 : vector<256x1xf32>
      %cst_5 = arith.constant 2.550000e+02 : f32
      %14 = vector.broadcast %cst_5 : f32 to vector<256x1xf32>
      %15 = arith.mulf %13, %14 : vector<256x1xf32>
      %16 = vector.broadcast %5 : vector<1x256xf32> to vector<256x256xf32>
      %17 = vector.broadcast %15 : vector<256x1xf32> to vector<256x256xf32>
      %18 = arith.subf %16, %17 : vector<256x256xf32>
      %cst_6 = arith.constant 3.000000e+01 : f32
      %19 = vector.broadcast %cst_6 : f32 to vector<256x256xf32>
      %20 = arith.minimumf %18, %19 : vector<256x256xf32>
      %21 = math.exp %20 : vector<256x256xf32>
      %cst_7 = arith.constant 1.000000e+00 : f32
      %22 = vector.broadcast %cst_7 : f32 to vector<256x256xf32>
      %23 = arith.addf %22, %21 : vector<256x256xf32>
      %cst_8 = arith.constant 0.36931929 : f32
      %24 = vector.broadcast %cst_8 : f32 to vector<256x256xf32>
      %25 = arith.mulf %21, %24 : vector<256x256xf32>
      %cst_9 = arith.constant 1.000000e+00 : f32
      %26 = vector.broadcast %cst_9 : f32 to vector<256x256xf32>
      %27 = arith.addf %26, %25 : vector<256x256xf32>
      %28 = arith.mulf %23, %27 : vector<256x256xf32>
      %29 = tpu.reciprocal %28 {approx = true} : vector<256x256xf32> -> vector<256x256xf32>
      %30 = arith.mulf %28, %29 : vector<256x256xf32>
      %cst_10 = arith.constant 2.000000e+00 : f32
      %31 = vector.broadcast %cst_10 : f32 to vector<256x256xf32>
      %32 = arith.subf %31, %30 : vector<256x256xf32>
      %33 = arith.mulf %29, %32 : vector<256x256xf32>
      %34 = arith.mulf %21, %33 : vector<256x256xf32>
      %cst_11 = arith.constant dense<0.000000e+00> : vector<256xf32>
      %35 = vector.multi_reduction <add>, %34, %cst_11 [0] : vector<256x256xf32> to vector<256xf32>
      %36 = vector.shape_cast %35 : vector<256xf32> to vector<1x256xf32>
      %cst_12 = arith.constant dense<0.000000e+00> : vector<1xf32>
      %37 = vector.multi_reduction <add>, %36, %cst_12 [1] : vector<1x256xf32> to vector<1xf32>
      %38 = vector.shape_cast %37 : vector<1xf32> to vector<1x1xf32>
      %39 = tpu.reciprocal %38 {approx = true} : vector<1x1xf32> -> vector<1x1xf32>
      %40 = arith.mulf %38, %39 : vector<1x1xf32>
      %cst_13 = arith.constant 2.000000e+00 : f32
      %41 = vector.broadcast %cst_13 : f32 to vector<1x1xf32>
      %42 = arith.subf %41, %40 : vector<1x1xf32>
      %43 = arith.mulf %39, %42 : vector<1x1xf32>
      %44 = vector.broadcast %43 : vector<1x1xf32> to vector<1x256xf32>
      %45 = arith.mulf %36, %44 : vector<1x256xf32>
      %46 = arith.index_cast %arg3 : i32 to index
      %c0_14 = arith.constant 0 : index
      %47 = vector.load %arg2[%46, %c0_14] : memref<8x256xf32, #tpu.memory_space<vmem>>, vector<1x256xf32>
      tpu.vector_store %arg2[%46, %c0_14], %45 {strides = array<i32>} : memref<8x256xf32, #tpu.memory_space<vmem>>, vector<1x256xf32>,
    }
    %c8_i32_1 = arith.constant 8 : i32
    return
  }
  func.func @transform_0(%arg0: i32) -> (i32, i32, i32) {
    %c0_i32 = arith.constant 0 : i32
    %c0_i32_0 = arith.constant 0 : i32
    %c0_i32_1 = arith.constant 0 : i32
    return %arg0, %c0_i32, %c0_i32_0 : i32, i32, i32
  }
  func.func @transform_1(%arg0: i32) -> (i32, i32) {
    %c0_i32 = arith.constant 0 : i32
    %c0_i32_0 = arith.constant 0 : i32
    return %arg0, %c0_i32 : i32, i32
  }
}

</mosaic_0001>

<llo_original>
// kernel: tpu_custom_call.1
$region0: #{tpu_custom_call.1}
  #allocation0 [shape = 'u32[]', space=smem, size = 0x4, offset = 0x4, fixed_abs, tag = 'smem constant byte address 0x4 - core index']
  #allocation1 [shape = 'u32[144,128]{1,0:T(1,128)}', space=vmem, size = 0x12000, scoped, tag = 'internal scratch']
  %s0 = inlined_call_operand.vmem [shape: f32[16,256,1], index: 0, kind: input, shape index: {}]
  %s1 = inlined_call_operand.hbm [shape: f32[16,256], index: 1, kind: output, shape index: {}]
  %s2 = sld [smem:[#allocation0]]
  $region44: #{tpu_custom_call.1} parent=0
    _
  %s4 = ssub.s32 1, %s2
  %s5 = scalar_select 0, %s4, %s2
  $region1: #{tpu_custom_call.1} parent=0
    #allocation2 [shape = 'u8[16384]{0}', space=vmem, size = 0x4000, scoped, tag = 'output window, operand 0']
    #allocation3 [shape = 's32[2]{0}', space=sflag, size = 0x8, scoped, tag = 'scoped memory for tpu_custom_call.1']
    %6 = vsyncpa [#allocation3], 0
    %s7 = scalar_lea.sflag [#allocation3], 1
    %8 = vsyncpa %s7, 0
    loop: start=0, step=1, limit=4
    $region2: #{tpu_custom_call.1} parent=1 // loop_pre_header
      _
    $region3: #{tpu_custom_call.1} parent=1 // loop_header
      %s10 = sphi 0, %s14
      %p11 = scmp.ge.s32.totalorder %s10, 4
      %s20 = sphi 0, %s22
      %s23 = sphi 0, %s20
      %s24 = sphi 0, %s23
      %s40 = sphi 0, %s24
      %s46 = sphi 0, %s48
      %s49 = sphi 0, %s46
      %s50 = sphi 0, %s49
      %s66 = sphi 0, %s50
    $region4: #{tpu_custom_call.1} parent=1 // loop_header_branch
      %13 = sbr.rel (%p11) target = $region8
    $region5: #{tpu_custom_call.1} parent=1 // loop_body
      %s15 = ssub.s32 %s10, 1
      %s16 = ssub.s32 %s10, 2
      %s17 = sadd.s32 %s10, 1
      %s18 = ssub.s32 %s10, %s17
      %p19 = scmp.eq.s32.totalorder %s18, 0
      %s21 = sadd.s32 %s20, 1
      %s22 = scalar_select %p19, %s20, %s21
      %p25 = pneg %p19
      %p26 = scmp.eq.s32.totalorder %s10, 1
      %p27 = por %p25, %p26
      %p28 = scmp.ne.s32.totalorder %s20, %s23
      %p29 = scmp.eq.s32.totalorder %s10, 0
      %p30 = por %p28, %p29
      %p31 = scmp.ne.s32.totalorder %s20, %s23
      %p32 = scmp.eq.s32.totalorder %s15, 1
      %p33 = por %p31, %p32
      %p34 = scmp.ne.s32.totalorder %s23, %s24
      %p35 = scmp.eq.s32.totalorder %s15, 0
      %p36 = por %p34, %p35
      %p37 = scmp.ne.s32.totalorder %s23, %s24
      %p38 = scmp.eq.s32.totalorder %s16, 1
      %p39 = por %p37, %p38
      %p41 = scmp.ne.s32.totalorder %s24, %s40
      %p42 = scmp.eq.s32.totalorder %s16, 0
      %p43 = por %p41, %p42
      %s44 = ssub.s32 %s10, %s17
      %p45 = scmp.eq.s32.totalorder %s44, 0
      %s47 = sadd.s32 %s46, 1
      %s48 = scalar_select %p45, %s46, %s47
      %p51 = pneg %p45
      %p52 = scmp.eq.s32.totalorder %s10, 1
      %p53 = por %p51, %p52
      %p54 = scmp.ne.s32.totalorder %s46, %s49
      %p55 = scmp.eq.s32.totalorder %s10, 0
      %p56 = por %p54, %p55
      %p57 = scmp.ne.s32.totalorder %s46, %s49
      %p58 = scmp.eq.s32.totalorder %s15, 1
      %p59 = por %p57, %p58
      %p60 = scmp.ne.s32.totalorder %s49, %s50
      %p61 = scmp.eq.s32.totalorder %s15, 0
      %p62 = por %p60, %p61
      %p63 = scmp.ne.s32.totalorder %s49, %s50
      %p64 = scmp.eq.s32.totalorder %s16, 1
      %p65 = por %p63, %p64
      %p67 = scmp.ne.s32.totalorder %s50, %s66
      %p68 = scmp.eq.s32.totalorder %s16, 0
      %p69 = por %p67, %p68
      %p70 = scmp.le.s32.totalorder 1, %s10
      %p71 = scmp.lt.s32.totalorder %s10, 3
      %p72 = pnand %p70, %p71
      %p73 = pneg %p72
      // Predicated region
      $region9: #{tpu_custom_call.1} parent=5 // pred_check
        _
      $region10: #{tpu_custom_call.1} parent=5 // pred_check_branch
        %75 = sbr.rel (%p72) target = $region12
      $region11: #{tpu_custom_call.1} parent=5 // pred_region
        %s76 = ssub.s32 %s10, 1
      $region12: #{tpu_custom_call.1} parent=5 // pred_fallthru
        _
      %p77 = scmp.lt.s32.totalorder %s10, 2
      // Predicated region
      $region13: #{tpu_custom_call.1} parent=5 // pred_check
        %p78 = pneg %p77
      $region14: #{tpu_custom_call.1} parent=5 // pred_check_branch
        %80 = sbr.rel (%p78) target = $region16
      $region15: #{tpu_custom_call.1} parent=5 // pred_region
        // Predicated region
        $region17: #{tpu_custom_call.1} parent=15 // pred_check
          %p81 = pneg %p30
        $region18: #{tpu_custom_call.1} parent=15 // pred_check_branch
          %83 = sbr.rel (%p81) target = $region20
        $region19: #{tpu_custom_call.1} parent=15 // pred_region
          %s84 = smul.u32 8, %s10
          %p85 = scmp.lt.s32.totalorder %s84, 15
          %s86 = scalar_select %p85, %s84, 15
          %s87 = smul.addr %s86, 32
          %s88 = smul.addr %s87, 8
          %s89 = scalar_lea.vmem %s0, %s88
          %s90 = smul.u32 8, %s10
        $region20: #{tpu_custom_call.1} parent=15 // pred_fallthru
          _
      $region16: #{tpu_custom_call.1} parent=5 // pred_fallthru
        _
      %p91 = scmp.le.s32.totalorder 1, %s10
      %p92 = scmp.lt.s32.totalorder %s10, 3
      %p93 = pnand %p91, %p92
      %p94 = pneg %p93
      // Predicated region
      $region21: #{tpu_custom_call.1} parent=5 // pred_check
        _
      $region22: #{tpu_custom_call.1} parent=5 // pred_check_branch
        %96 = sbr.rel (%p93) target = $region24
      $region23: #{tpu_custom_call.1} parent=5 // pred_region
        %s97 = ssub.s32 %s10, 1
        %s98 = smul.u32 8, %s15
        %p99 = scmp.lt.s32.totalorder %s98, 15
        %s100 = scalar_select %p99, %s98, 15
        %s101 = smul.addr %s100, 32
        %s102 = smul.addr %s101, 8
        %s103 = scalar_lea.vmem %s0, %s102
        %p104 = pneg %p36
        %p105 = pneg %p33
        %p106 = pneg %p62
        %p107 = pneg %p59
        %s108 = sand.u32 %s49, 1
        %s109 = scalar_lea.sflag [#allocation3], %s108
        %s110 = sand.u32 %s49, 1
        %s111 = smul.addr %s110, 16
        %s112 = scalar_lea.vmem [#allocation2], %s111
        %s113 = smul.u32 8, %s15
        %p114 = scmp.lt.s32.totalorder %s113, 15
        %s115 = scalar_select %p114, %s113, 15
        %s116 = smul.addr %s115, 32
        %s117 = smul.addr %s116, 8
        %s118 = scalar_lea.vmem %s0, %s117
        %s119 = smul.u32 8, %s15
        %v120 = vlaneseq
        %v121 = vand.u32 %v120, 127
        %v122 = vadd.s32 %v121, 128
        %v123 = vcvt.s32.f32 %v121
        %v124 = vcvt.s32.f32 %v122
        %v125 = vmul.f32 %v123, 0.99609375
        %v126 = vmul.f32 %v124, 0.99609375
        %v127 = vadd.f32 %v125, 0.99609375
        %v128 = vadd.f32 %v126, 0.99609375
        loop: start=0, step=1, limit=8
        $region25: #{tpu_custom_call.1} parent=23 // loop_pre_header
          _
        $region26: #{tpu_custom_call.1} parent=23 // loop_header
          %s130 = sphi 0, %s134
          %p131 = scmp.ge.s32.totalorder %s130, 8
        $region27: #{tpu_custom_call.1} parent=23 // loop_header_branch
          %133 = sbr.rel (%p131) target = $region31
        $region28: #{tpu_custom_call.1} parent=23 // loop_body
          %s135 = smul.u32 %s130, 256
          %s136 = scalar_lea.vmem %s118, %s135
          %v137 = vld [vmem:[%s136] sm:$0xff]
          %v138 = vld [vmem:[%s136 + $0x8] sm:$0xff]
          %v139 = vld [vmem:[%s136 + $0x10] sm:$0xff]
          %v140 = vld [vmem:[%s136 + $0x18] sm:$0xff]
          %v141 = vld [vmem:[%s136 + $0x20] sm:$0xff]
          %v142 = vld [vmem:[%s136 + $0x28] sm:$0xff]
          %v143 = vld [vmem:[%s136 + $0x30] sm:$0xff]
          %v144 = vld [vmem:[%s136 + $0x38] sm:$0xff]
          %v145 = vld [vmem:[%s136 + $0x40] sm:$0xff]
          %v146 = vld [vmem:[%s136 + $0x48] sm:$0xff]
          %v147 = vld [vmem:[%s136 + $0x50] sm:$0xff]
          %v148 = vld [vmem:[%s136 + $0x58] sm:$0xff]
          %v149 = vld [vmem:[%s136 + $0x60] sm:$0xff]
          %v150 = vld [vmem:[%s136 + $0x68] sm:$0xff]
          %v151 = vld [vmem:[%s136 + $0x70] sm:$0xff]
          %v152 = vld [vmem:[%s136 + $0x78] sm:$0xff]
          %v153 = vld [vmem:[%s136 + $0x80] sm:$0xff]
          %v154 = vld [vmem:[%s136 + $0x88] sm:$0xff]
          %v155 = vld [vmem:[%s136 + $0x90] sm:$0xff]
          %v156 = vld [vmem:[%s136 + $0x98] sm:$0xff]
          %v157 = vld [vmem:[%s136 + $0xa0] sm:$0xff]
          %v158 = vld [vmem:[%s136 + $0xa8] sm:$0xff]
          %v159 = vld [vmem:[%s136 + $0xb0] sm:$0xff]
          %v160 = vld [vmem:[%s136 + $0xb8] sm:$0xff]
          %v161 = vld [vmem:[%s136 + $0xc0] sm:$0xff]
          %v162 = vld [vmem:[%s136 + $0xc8] sm:$0xff]
          %v163 = vld [vmem:[%s136 + $0xd0] sm:$0xff]
          %v164 = vld [vmem:[%s136 + $0xd8] sm:$0xff]
          %v165 = vld [vmem:[%s136 + $0xe0] sm:$0xff]
          %v166 = vld [vmem:[%s136 + $0xe8] sm:$0xff]
          %v167 = vld [vmem:[%s136 + $0xf0] sm:$0xff]
          %v168 = vld [vmem:[%s136 + $0xf8] sm:$0xff]
          %v169 = vmax.f32 %v137, 0.0
          %v170 = vmax.f32 %v138, 0.0
          %v171 = vmax.f32 %v139, 0.0
          %v172 = vmax.f32 %v140, 0.0
          %v173 = vmax.f32 %v141, 0.0
          %v174 = vmax.f32 %v142, 0.0
          %v175 = vmax.f32 %v143, 0.0
          %v176 = vmax.f32 %v144, 0.0
          %v177 = vmax.f32 %v145, 0.0
          %v178 = vmax.f32 %v146, 0.0
          %v179 = vmax.f32 %v147, 0.0
          %v180 = vmax.f32 %v148, 0.0
          %v181 = vmax.f32 %v149, 0.0
          %v182 = vmax.f32 %v150, 0.0
          %v183 = vmax.f32 %v151, 0.0
          %v184 = vmax.f32 %v152, 0.0
          %v185 = vmax.f32 %v153, 0.0
          %v186 = vmax.f32 %v154, 0.0
          %v187 = vmax.f32 %v155, 0.0
          %v188 = vmax.f32 %v156, 0.0
          %v189 = vmax.f32 %v157, 0.0
          %v190 = vmax.f32 %v158, 0.0
          %v191 = vmax.f32 %v159, 0.0
          %v192 = vmax.f32 %v160, 0.0
          %v193 = vmax.f32 %v161, 0.0
          %v194 = vmax.f32 %v162, 0.0
          %v195 = vmax.f32 %v163, 0.0
          %v196 = vmax.f32 %v164, 0.0
          %v197 = vmax.f32 %v165, 0.0
          %v198 = vmax.f32 %v166, 0.0
          %v199 = vmax.f32 %v167, 0.0
          %v200 = vmax.f32 %v168, 0.0
          %v201 = vmin.f32 %v169, 1.0
          %v202 = vmin.f32 %v170, 1.0
          %v203 = vmin.f32 %v171, 1.0
          %v204 = vmin.f32 %v172, 1.0
          %v205 = vmin.f32 %v173, 1.0
          %v206 = vmin.f32 %v174, 1.0
          %v207 = vmin.f32 %v175, 1.0
          %v208 = vmin.f32 %v176, 1.0
          %v209 = vmin.f32 %v177, 1.0
          %v210 = vmin.f32 %v178, 1.0
          %v211 = vmin.f32 %v179, 1.0
          %v212 = vmin.f32 %v180, 1.0
          %v213 = vmin.f32 %v181, 1.0
          %v214 = vmin.f32 %v182, 1.0
          %v215 = vmin.f32 %v183, 1.0
          %v216 = vmin.f32 %v184, 1.0
          %v217 = vmin.f32 %v185, 1.0
          %v218 = vmin.f32 %v186, 1.0
          %v219 = vmin.f32 %v187, 1.0
          %v220 = vmin.f32 %v188, 1.0
          %v221 = vmin.f32 %v189, 1.0
          %v222 = vmin.f32 %v190, 1.0
          %v223 = vmin.f32 %v191, 1.0
          %v224 = vmin.f32 %v192, 1.0
          %v225 = vmin.f32 %v193, 1.0
          %v226 = vmin.f32 %v194, 1.0
          %v227 = vmin.f32 %v195, 1.0
          %v228 = vmin.f32 %v196, 1.0
          %v229 = vmin.f32 %v197, 1.0
          %v230 = vmin.f32 %v198, 1.0
          %v231 = vmin.f32 %v199, 1.0
          %v232 = vmin.f32 %v200, 1.0
          %v233 = vmul.f32 %v201, 255.0
          %v234 = vmul.f32 %v202, 255.0
          %v235 = vmul.f32 %v203, 255.0
          %v236 = vmul.f32 %v204, 255.0
          %v237 = vmul.f32 %v205, 255.0
          %v238 = vmul.f32 %v206, 255.0
          %v239 = vmul.f32 %v207, 255.0
          %v240 = vmul.f32 %v208, 255.0
          %v241 = vmul.f32 %v209, 255.0
          %v242 = vmul.f32 %v210, 255.0
          %v243 = vmul.f32 %v211, 255.0
          %v244 = vmul.f32 %v212, 255.0
          %v245 = vmul.f32 %v213, 255.0
          %v246 = vmul.f32 %v214, 255.0
          %v247 = vmul.f32 %v215, 255.0
          %v248 = vmul.f32 %v216, 255.0
          %v249 = vmul.f32 %v217, 255.0
          %v250 = vmul.f32 %v218, 255.0
          %v251 = vmul.f32 %v219, 255.0
          %v252 = vmul.f32 %v220, 255.0
          %v253 = vmul.f32 %v221, 255.0
          %v254 = vmul.f32 %v222, 255.0
          %v255 = vmul.f32 %v223, 255.0
          %v256 = vmul.f32 %v224, 255.0
          %v257 = vmul.f32 %v225, 255.0
          %v258 = vmul.f32 %v226, 255.0
          %v259 = vmul.f32 %v227, 255.0
          %v260 = vmul.f32 %v228, 255.0
          %v261 = vmul.f32 %v229, 255.0
          %v262 = vmul.f32 %v230, 255.0
          %v263 = vmul.f32 %v231, 255.0
          %v264 = vmul.f32 %v232, 255.0
          %266 = vset.pattern.permute.xlu0 0
          %267 = vperm.xlu0 %266, %v233
          %v268 = vpop.permute.xlu0 %267
          %271 = vset.pattern.permute.xlu0 0
          %272 = vperm.xlu0 %271, %v234
          %v273 = vpop.permute.xlu0 %272
          %276 = vset.pattern.permute.xlu0 0
          %277 = vperm.xlu0 %276, %v235
          %v278 = vpop.permute.xlu0 %277
          %281 = vset.pattern.permute.xlu0 0
          %282 = vperm.xlu0 %281, %v236
          %v283 = vpop.permute.xlu0 %282
          %286 = vset.pattern.permute.xlu0 0
          %287 = vperm.xlu0 %286, %v237
          %v288 = vpop.permute.xlu0 %287
          %291 = vset.pattern.permute.xlu0 0
          %292 = vperm.xlu0 %291, %v238
          %v293 = vpop.permute.xlu0 %292
          %296 = vset.pattern.permute.xlu0 0
          %297 = vperm.xlu0 %296, %v239
          %v298 = vpop.permute.xlu0 %297
          %301 = vset.pattern.permute.xlu0 0
          %302 = vperm.xlu0 %301, %v240
          %v303 = vpop.permute.xlu0 %302
          %306 = vset.pattern.permute.xlu0 0
          %307 = vperm.xlu0 %306, %v241
          %v308 = vpop.permute.xlu0 %307
          %311 = vset.pattern.permute.xlu0 0
          %312 = vperm.xlu0 %311, %v242
          %v313 = vpop.permute.xlu0 %312
          %316 = vset.pattern.permute.xlu0 0
          %317 = vperm.xlu0 %316, %v243
          %v318 = vpop.permute.xlu0 %317
          %321 = vset.pattern.permute.xlu0 0
          %322 = vperm.xlu0 %321, %v244
          %v323 = vpop.permute.xlu0 %322
          %326 = vset.pattern.permute.xlu0 0
          %327 = vperm.xlu0 %326, %v245
          %v328 = vpop.permute.xlu0 %327
          %331 = vset.pattern.permute.xlu0 0
          %332 = vperm.xlu0 %331, %v246
          %v333 = vpop.permute.xlu0 %332
          %336 = vset.pattern.permute.xlu0 0
          %337 = vperm.xlu0 %336, %v247
          %v338 = vpop.permute.xlu0 %337
          %341 = vset.pattern.permute.xlu0 0
          %342 = vperm.xlu0 %341, %v248
          %v343 = vpop.permute.xlu0 %342
          %346 = vset.pattern.permute.xlu0 0
          %347 = vperm.xlu0 %346, %v249
          %v348 = vpop.permute.xlu0 %347
          %351 = vset.pattern.permute.xlu0 0
          %352 = vperm.xlu0 %351, %v250
          %v353 = vpop.permute.xlu0 %352
          %356 = vset.pattern.permute.xlu0 0
          %357 = vperm.xlu0 %356, %v251
          %v358 = vpop.permute.xlu0 %357
          %361 = vset.pattern.permute.xlu0 0
          %362 = vperm.xlu0 %361, %v252
          %v363 = vpop.permute.xlu0 %362
          %366 = vset.pattern.permute.xlu0 0
          %367 = vperm.xlu0 %366, %v253
          %v368 = vpop.permute.xlu0 %367
          %371 = vset.pattern.permute.xlu0 0
          %372 = vperm.xlu0 %371, %v254
          %v373 = vpop.permute.xlu0 %372
          %376 = vset.pattern.permute.xlu0 0
          %377 = vperm.xlu0 %376, %v255
          %v378 = vpop.permute.xlu0 %377
          %381 = vset.pattern.permute.xlu0 0
          %382 = vperm.xlu0 %381, %v256
          %v383 = vpop.permute.xlu0 %382
          %386 = vset.pattern.permute.xlu0 0
          %387 = vperm.xlu0 %386, %v257
          %v388 = vpop.permute.xlu0 %387
          %391 = vset.pattern.permute.xlu0 0
          %392 = vperm.xlu0 %391, %v258
          %v393 = vpop.permute.xlu0 %392
          %396 = vset.pattern.permute.xlu0 0
          %397 = vperm.xlu0 %396, %v259
          %v398 = vpop.permute.xlu0 %397
          %401 = vset.pattern.permute.xlu0 0
          %402 = vperm.xlu0 %401, %v260
          %v403 = vpop.permute.xlu0 %402
          %406 = vset.pattern.permute.xlu0 0
          %407 = vperm.xlu0 %406, %v261
          %v408 = vpop.permute.xlu0 %407
          %411 = vset.pattern.permute.xlu0 0
          %412 = vperm.xlu0 %411, %v262
          %v413 = vpop.permute.xlu0 %412
          %416 = vset.pattern.permute.xlu0 0
          %417 = vperm.xlu0 %416, %v263
          %v418 = vpop.permute.xlu0 %417
          %421 = vset.pattern.permute.xlu0 0
          %422 = vperm.xlu0 %421, %v264
          %v423 = vpop.permute.xlu0 %422
          %v425 = vsub.f32 %v127, %v268
          %v426 = vsub.f32 %v128, %v268
          %v427 = vsub.f32 %v127, %v273
          %v428 = vsub.f32 %v128, %v273
          %v429 = vsub.f32 %v127, %v278
          %v430 = vsub.f32 %v128, %v278
          %v431 = vsub.f32 %v127, %v283
          %v432 = vsub.f32 %v128, %v283
          %v433 = vsub.f32 %v127, %v288
          %v434 = vsub.f32 %v128, %v288
          %v435 = vsub.f32 %v127, %v293
          %v436 = vsub.f32 %v128, %v293
          %v437 = vsub.f32 %v127, %v298
          %v438 = vsub.f32 %v128, %v298
          %v439 = vsub.f32 %v127, %v303
          %v440 = vsub.f32 %v128, %v303
          %v441 = vsub.f32 %v127, %v308
          %v442 = vsub.f32 %v128, %v308
          %v443 = vsub.f32 %v127, %v313
          %v444 = vsub.f32 %v128, %v313
          %v445 = vsub.f32 %v127, %v318
          %v446 = vsub.f32 %v128, %v318
          %v447 = vsub.f32 %v127, %v323
          %v448 = vsub.f32 %v128, %v323
          %v449 = vsub.f32 %v127, %v328
          %v450 = vsub.f32 %v128, %v328
          %v451 = vsub.f32 %v127, %v333
          %v452 = vsub.f32 %v128, %v333
          %v453 = vsub.f32 %v127, %v338
          %v454 = vsub.f32 %v128, %v338
          %v455 = vsub.f32 %v127, %v343
          %v456 = vsub.f32 %v128, %v343
          %v457 = vsub.f32 %v127, %v348
          %v458 = vsub.f32 %v128, %v348
          %v459 = vsub.f32 %v127, %v353
          %v460 = vsub.f32 %v128, %v353
          %v461 = vsub.f32 %v127, %v358
          %v462 = vsub.f32 %v128, %v358
          %v463 = vsub.f32 %v127, %v363
          %v464 = vsub.f32 %v128, %v363
          %v465 = vsub.f32 %v127, %v368
          %v466 = vsub.f32 %v128, %v368
          %v467 = vsub.f32 %v127, %v373
          %v468 = vsub.f32 %v128, %v373
          %v469 = vsub.f32 %v127, %v378
          %v470 = vsub.f32 %v128, %v378
          %v471 = vsub.f32 %v127, %v383
          %v472 = vsub.f32 %v128, %v383
          %v473 = vsub.f32 %v127, %v388
          %v474 = vsub.f32 %v128, %v388
          %v475 = vsub.f32 %v127, %v393
          %v476 = vsub.f32 %v128, %v393
          %v477 = vsub.f32 %v127, %v398
          %v478 = vsub.f32 %v128, %v398
          %v479 = vsub.f32 %v127, %v403
          %v480 = vsub.f32 %v128, %v403
          %v481 = vsub.f32 %v127, %v408
          %v482 = vsub.f32 %v128, %v408
          %v483 = vsub.f32 %v127, %v413
          %v484 = vsub.f32 %v128, %v413
          %v485 = vsub.f32 %v127, %v418
          %v486 = vsub.f32 %v128, %v418
          %v487 = vsub.f32 %v127, %v423
          %v488 = vsub.f32 %v128, %v423
          %v489 = vmin.f32 %v425, 30.0
          %v490 = vmin.f32 %v426, 30.0
          %v491 = vmin.f32 %v427, 30.0
          %v492 = vmin.f32 %v428, 30.0
          %v493 = vmin.f32 %v429, 30.0
          %v494 = vmin.f32 %v430, 30.0
          %v495 = vmin.f32 %v431, 30.0
          %v496 = vmin.f32 %v432, 30.0
          %v497 = vmin.f32 %v433, 30.0
          %v498 = vmin.f32 %v434, 30.0
          %v499 = vmin.f32 %v435, 30.0
          %v500 = vmin.f32 %v436, 30.0
          %v501 = vmin.f32 %v437, 30.0
          %v502 = vmin.f32 %v438, 30.0
          %v503 = vmin.f32 %v439, 30.0
          %v504 = vmin.f32 %v440, 30.0
          %v505 = vmin.f32 %v441, 30.0
          %v506 = vmin.f32 %v442, 30.0
          %v507 = vmin.f32 %v443, 30.0
          %v508 = vmin.f32 %v444, 30.0
          %v509 = vmin.f32 %v445, 30.0
          %v510 = vmin.f32 %v446, 30.0
          %v511 = vmin.f32 %v447, 30.0
          %v512 = vmin.f32 %v448, 30.0
          %v513 = vmin.f32 %v449, 30.0
          %v514 = vmin.f32 %v450, 30.0
          %v515 = vmin.f32 %v451, 30.0
          %v516 = vmin.f32 %v452, 30.0
          %v517 = vmin.f32 %v453, 30.0
          %v518 = vmin.f32 %v454, 30.0
          %v519 = vmin.f32 %v455, 30.0
          %v520 = vmin.f32 %v456, 30.0
          %v521 = vmin.f32 %v457, 30.0
          %v522 = vmin.f32 %v458, 30.0
          %v523 = vmin.f32 %v459, 30.0
          %v524 = vmin.f32 %v460, 30.0
          %v525 = vmin.f32 %v461, 30.0
          %v526 = vmin.f32 %v462, 30.0
          %v527 = vmin.f32 %v463, 30.0
          %v528 = vmin.f32 %v464, 30.0
          %v529 = vmin.f32 %v465, 30.0
          %v530 = vmin.f32 %v466, 30.0
          %v531 = vmin.f32 %v467, 30.0
          %v532 = vmin.f32 %v468, 30.0
          %v533 = vmin.f32 %v469, 30.0
          %v534 = vmin.f32 %v470, 30.0
          %v535 = vmin.f32 %v471, 30.0
          %v536 = vmin.f32 %v472, 30.0
          %v537 = vmin.f32 %v473, 30.0
          %v538 = vmin.f32 %v474, 30.0
          %v539 = vmin.f32 %v475, 30.0
          %v540 = vmin.f32 %v476, 30.0
          %v541 = vmin.f32 %v477, 30.0
          %v542 = vmin.f32 %v478, 30.0
          %v543 = vmin.f32 %v479, 30.0
          %v544 = vmin.f32 %v480, 30.0
          %v545 = vmin.f32 %v481, 30.0
          %v546 = vmin.f32 %v482, 30.0
          %v547 = vmin.f32 %v483, 30.0
          %v548 = vmin.f32 %v484, 30.0
          %v549 = vmin.f32 %v485, 30.0
          %v550 = vmin.f32 %v486, 30.0
          %v551 = vmin.f32 %v487, 30.0
          %v552 = vmin.f32 %v488, 30.0
          %v553 = vmul.f32 %v489, 1.442695
          %v554 = vpow.pop %v553
          %v555 = vmul.f32 %v490, 1.442695
          %v556 = vpow.pop %v555
          %v557 = vmul.f32 %v491, 1.442695
          %v558 = vpow.pop %v557
          %v559 = vmul.f32 %v492, 1.442695
          %v560 = vpow.pop %v559
          %v561 = vmul.f32 %v493, 1.442695
          %v562 = vpow.pop %v561
          %v563 = vmul.f32 %v494, 1.442695
          %v564 = vpow.pop %v563
          %v565 = vmul.f32 %v495, 1.442695
          %v566 = vpow.pop %v565
          %v567 = vmul.f32 %v496, 1.442695
          %v568 = vpow.pop %v567
          %v569 = vmul.f32 %v497, 1.442695
          %v570 = vpow.pop %v569
          %v571 = vmul.f32 %v498, 1.442695
          %v572 = vpow.pop %v571
          %v573 = vmul.f32 %v499, 1.442695
          %v574 = vpow.pop %v573
          %v575 = vmul.f32 %v500, 1.442695
          %v576 = vpow.pop %v575
          %v577 = vmul.f32 %v501, 1.442695
          %v578 = vpow.pop %v577
          %v579 = vmul.f32 %v502, 1.442695
          %v580 = vpow.pop %v579
          %v581 = vmul.f32 %v503, 1.442695
          %v582 = vpow.pop %v581
          %v583 = vmul.f32 %v504, 1.442695
          %v584 = vpow.pop %v583
          %v585 = vmul.f32 %v505, 1.442695
          %v586 = vpow.pop %v585
          %v587 = vmul.f32 %v506, 1.442695
          %v588 = vpow.pop %v587
          %v589 = vmul.f32 %v507, 1.442695
          %v590 = vpow.pop %v589
          %v591 = vmul.f32 %v508, 1.442695
          %v592 = vpow.pop %v591
          %v593 = vmul.f32 %v509, 1.442695
          %v594 = vpow.pop %v593
          %v595 = vmul.f32 %v510, 1.442695
          %v596 = vpow.pop %v595
          %v597 = vmul.f32 %v511, 1.442695
          %v598 = vpow.pop %v597
          %v599 = vmul.f32 %v512, 1.442695
          %v600 = vpow.pop %v599
          %v601 = vmul.f32 %v513, 1.442695
          %v602 = vpow.pop %v601
          %v603 = vmul.f32 %v514, 1.442695
          %v604 = vpow.pop %v603
          %v605 = vmul.f32 %v515, 1.442695
          %v606 = vpow.pop %v605
          %v607 = vmul.f32 %v516, 1.442695
          %v608 = vpow.pop %v607
          %v609 = vmul.f32 %v517, 1.442695
          %v610 = vpow.pop %v609
          %v611 = vmul.f32 %v518, 1.442695
          %v612 = vpow.pop %v611
          %v613 = vmul.f32 %v519, 1.442695
          %v614 = vpow.pop %v613
          %v615 = vmul.f32 %v520, 1.442695
          %v616 = vpow.pop %v615
          %v617 = vmul.f32 %v521, 1.442695
          %v618 = vpow.pop %v617
          %v619 = vmul.f32 %v522, 1.442695
          %v620 = vpow.pop %v619
          %v621 = vmul.f32 %v523, 1.442695
          %v622 = vpow.pop %v621
          %v623 = vmul.f32 %v524, 1.442695
          %v624 = vpow.pop %v623
          %v625 = vmul.f32 %v525, 1.442695
          %v626 = vpow.pop %v625
          %v627 = vmul.f32 %v526, 1.442695
          %v628 = vpow.pop %v627
          %v629 = vmul.f32 %v527, 1.442695
          %v630 = vpow.pop %v629
          %v631 = vmul.f32 %v528, 1.442695
          %v632 = vpow.pop %v631
          %v633 = vmul.f32 %v529, 1.442695
          %v634 = vpow.pop %v633
          %v635 = vmul.f32 %v530, 1.442695
          %v636 = vpow.pop %v635
          %v637 = vmul.f32 %v531, 1.442695
          %v638 = vpow.pop %v637
          %v639 = vmul.f32 %v532, 1.442695
          %v640 = vpow.pop %v639
          %v641 = vmul.f32 %v533, 1.442695
          %v642 = vpow.pop %v641
          %v643 = vmul.f32 %v534, 1.442695
          %v644 = vpow.pop %v643
          %v645 = vmul.f32 %v535, 1.442695
          %v646 = vpow.pop %v645
          %v647 = vmul.f32 %v536, 1.442695
          %v648 = vpow.pop %v647
          %v649 = vmul.f32 %v537, 1.442695
          %v650 = vpow.pop %v649
          %v651 = vmul.f32 %v538, 1.442695
          %v652 = vpow.pop %v651
          %v653 = vmul.f32 %v539, 1.442695
          %v654 = vpow.pop %v653
          %v655 = vmul.f32 %v540, 1.442695
          %v656 = vpow.pop %v655
          %v657 = vmul.f32 %v541, 1.442695
          %v658 = vpow.pop %v657
          %v659 = vmul.f32 %v542, 1.442695
          %v660 = vpow.pop %v659
          %v661 = vmul.f32 %v543, 1.442695
          %v662 = vpow.pop %v661
          %v663 = vmul.f32 %v544, 1.442695
          %v664 = vpow.pop %v663
          %v665 = vmul.f32 %v545, 1.442695
          %v666 = vpow.pop %v665
          %v667 = vmul.f32 %v546, 1.442695
          %v668 = vpow.pop %v667
          %v669 = vmul.f32 %v547, 1.442695
          %v670 = vpow.pop %v669
          %v671 = vmul.f32 %v548, 1.442695
          %v672 = vpow.pop %v671
          %v673 = vmul.f32 %v549, 1.442695
          %v674 = vpow.pop %v673
          %v675 = vmul.f32 %v550, 1.442695
          %v676 = vpow.pop %v675
          %v677 = vmul.f32 %v551, 1.442695
          %v678 = vpow.pop %v677
          %v679 = vmul.f32 %v552, 1.442695
          %v680 = vpow.pop %v679
          %v681 = vadd.f32 %v554, 1.0
          %v682 = vadd.f32 %v556, 1.0
          %v683 = vadd.f32 %v558, 1.0
          %v684 = vadd.f32 %v560, 1.0
          %v685 = vadd.f32 %v562, 1.0
          %v686 = vadd.f32 %v564, 1.0
          %v687 = vadd.f32 %v566, 1.0
          %v688 = vadd.f32 %v568, 1.0
          %v689 = vadd.f32 %v570, 1.0
          %v690 = vadd.f32 %v572, 1.0
          %v691 = vadd.f32 %v574, 1.0
          %v692 = vadd.f32 %v576, 1.0
          %v693 = vadd.f32 %v578, 1.0
          %v694 = vadd.f32 %v580, 1.0
          %v695 = vadd.f32 %v582, 1.0
          %v696 = vadd.f32 %v584, 1.0
          %v697 = vadd.f32 %v586, 1.0
          %v698 = vadd.f32 %v588, 1.0
          %v699 = vadd.f32 %v590, 1.0
          %v700 = vadd.f32 %v592, 1.0
          %v701 = vadd.f32 %v594, 1.0
          %v702 = vadd.f32 %v596, 1.0
          %v703 = vadd.f32 %v598, 1.0
          %v704 = vadd.f32 %v600, 1.0
          %v705 = vadd.f32 %v602, 1.0
          %v706 = vadd.f32 %v604, 1.0
          %v707 = vadd.f32 %v606, 1.0
          %v708 = vadd.f32 %v608, 1.0
          %v709 = vadd.f32 %v610, 1.0
          %v710 = vadd.f32 %v612, 1.0
          %v711 = vadd.f32 %v614, 1.0
          %v712 = vadd.f32 %v616, 1.0
          %v713 = vadd.f32 %v618, 1.0
          %v714 = vadd.f32 %v620, 1.0
          %v715 = vadd.f32 %v622, 1.0
          %v716 = vadd.f32 %v624, 1.0
          %v717 = vadd.f32 %v626, 1.0
          %v718 = vadd.f32 %v628, 1.0
          %v719 = vadd.f32 %v630, 1.0
          %v720 = vadd.f32 %v632, 1.0
          %v721 = vadd.f32 %v634, 1.0
          %v722 = vadd.f32 %v636, 1.0
          %v723 = vadd.f32 %v638, 1.0
          %v724 = vadd.f32 %v640, 1.0
          %v725 = vadd.f32 %v642, 1.0
          %v726 = vadd.f32 %v644, 1.0
          %v727 = vadd.f32 %v646, 1.0
          %v728 = vadd.f32 %v648, 1.0
          %v729 = vadd.f32 %v650, 1.0
          %v730 = vadd.f32 %v652, 1.0
          %v731 = vadd.f32 %v654, 1.0
          %v732 = vadd.f32 %v656, 1.0
          %v733 = vadd.f32 %v658, 1.0
          %v734 = vadd.f32 %v660, 1.0
          %v735 = vadd.f32 %v662, 1.0
          %v736 = vadd.f32 %v664, 1.0
          %v737 = vadd.f32 %v666, 1.0
          %v738 = vadd.f32 %v668, 1.0
          %v739 = vadd.f32 %v670, 1.0
          %v740 = vadd.f32 %v672, 1.0
          %v741 = vadd.f32 %v674, 1.0
          %v742 = vadd.f32 %v676, 1.0
          %v743 = vadd.f32 %v678, 1.0
          %v744 = vadd.f32 %v680, 1.0
          %v745 = vmul.f32 %v554, 0.3693193
          %v746 = vmul.f32 %v556, 0.3693193
          %v747 = vmul.f32 %v558, 0.3693193
          %v748 = vmul.f32 %v560, 0.3693193
          %v749 = vmul.f32 %v562, 0.3693193
          %v750 = vmul.f32 %v564, 0.3693193
          %v751 = vmul.f32 %v566, 0.3693193
          %v752 = vmul.f32 %v568, 0.3693193
          %v753 = vmul.f32 %v570, 0.3693193
          %v754 = vmul.f32 %v572, 0.3693193
          %v755 = vmul.f32 %v574, 0.3693193
          %v756 = vmul.f32 %v576, 0.3693193
          %v757 = vmul.f32 %v578, 0.3693193
          %v758 = vmul.f32 %v580, 0.3693193
          %v759 = vmul.f32 %v582, 0.3693193
          %v760 = vmul.f32 %v584, 0.3693193
          %v761 = vmul.f32 %v586, 0.3693193
          %v762 = vmul.f32 %v588, 0.3693193
          %v763 = vmul.f32 %v590, 0.3693193
          %v764 = vmul.f32 %v592, 0.3693193
          %v765 = vmul.f32 %v594, 0.3693193
          %v766 = vmul.f32 %v596, 0.3693193
          %v767 = vmul.f32 %v598, 0.3693193
          %v768 = vmul.f32 %v600, 0.3693193
          %v769 = vmul.f32 %v602, 0.3693193
          %v770 = vmul.f32 %v604, 0.3693193
          %v771 = vmul.f32 %v606, 0.3693193
          %v772 = vmul.f32 %v608, 0.3693193
          %v773 = vmul.f32 %v610, 0.3693193
          %v774 = vmul.f32 %v612, 0.3693193
          %v775 = vmul.f32 %v614, 0.3693193
          %v776 = vmul.f32 %v616, 0.3693193
          %v777 = vmul.f32 %v618, 0.3693193
          %v778 = vmul.f32 %v620, 0.3693193
          %v779 = vmul.f32 %v622, 0.3693193
          %v780 = vmul.f32 %v624, 0.3693193
          %v781 = vmul.f32 %v626, 0.3693193
          %v782 = vmul.f32 %v628, 0.3693193
          %v783 = vmul.f32 %v630, 0.3693193
          %v784 = vmul.f32 %v632, 0.3693193
          %v785 = vmul.f32 %v634, 0.3693193
          %v786 = vmul.f32 %v636, 0.3693193
          %v787 = vmul.f32 %v638, 0.3693193
          %v788 = vmul.f32 %v640, 0.3693193
          %v789 = vmul.f32 %v642, 0.3693193
          %v790 = vmul.f32 %v644, 0.3693193
          %v791 = vmul.f32 %v646, 0.3693193
          %v792 = vmul.f32 %v648, 0.3693193
          %v793 = vmul.f32 %v650, 0.3693193
          %v794 = vmul.f32 %v652, 0.3693193
          %v795 = vmul.f32 %v654, 0.3693193
          %v796 = vmul.f32 %v656, 0.3693193
          %v797 = vmul.f32 %v658, 0.3693193
          %v798 = vmul.f32 %v660, 0.3693193
          %v799 = vmul.f32 %v662, 0.3693193
          %v800 = vmul.f32 %v664, 0.3693193
          %v801 = vmul.f32 %v666, 0.3693193
          %v802 = vmul.f32 %v668, 0.3693193
          %v803 = vmul.f32 %v670, 0.3693193
          %v804 = vmul.f32 %v672, 0.3693193
          %v805 = vmul.f32 %v674, 0.3693193
          %v806 = vmul.f32 %v676, 0.3693193
          %v807 = vmul.f32 %v678, 0.3693193
          %v808 = vmul.f32 %v680, 0.3693193
          %v809 = vadd.f32 %v745, 1.0
          %v810 = vadd.f32 %v746, 1.0
          %v811 = vadd.f32 %v747, 1.0
          %v812 = vadd.f32 %v748, 1.0
          %v813 = vadd.f32 %v749, 1.0
          %v814 = vadd.f32 %v750, 1.0
          %v815 = vadd.f32 %v751, 1.0
          %v816 = vadd.f32 %v752, 1.0
          %v817 = vadd.f32 %v753, 1.0
          %v818 = vadd.f32 %v754, 1.0
          %v819 = vadd.f32 %v755, 1.0
          %v820 = vadd.f32 %v756, 1.0
          %v821 = vadd.f32 %v757, 1.0
          %v822 = vadd.f32 %v758, 1.0
          %v823 = vadd.f32 %v759, 1.0
          %v824 = vadd.f32 %v760, 1.0
          %v825 = vadd.f32 %v761, 1.0
          %v826 = vadd.f32 %v762, 1.0
          %v827 = vadd.f32 %v763, 1.0
          %v828 = vadd.f32 %v764, 1.0
          %v829 = vadd.f32 %v765, 1.0
          %v830 = vadd.f32 %v766, 1.0
          %v831 = vadd.f32 %v767, 1.0
          %v832 = vadd.f32 %v768, 1.0
          %v833 = vadd.f32 %v769, 1.0
          %v834 = vadd.f32 %v770, 1.0
          %v835 = vadd.f32 %v771, 1.0
          %v836 = vadd.f32 %v772, 1.0
          %v837 = vadd.f32 %v773, 1.0
          %v838 = vadd.f32 %v774, 1.0
          %v839 = vadd.f32 %v775, 1.0
          %v840 = vadd.f32 %v776, 1.0
          %v841 = vadd.f32 %v777, 1.0
          %v842 = vadd.f32 %v778, 1.0
          %v843 = vadd.f32 %v779, 1.0
          %v844 = vadd.f32 %v780, 1.0
          %v845 = vadd.f32 %v781, 1.0
          %v846 = vadd.f32 %v782, 1.0
          %v847 = vadd.f32 %v783, 1.0
          %v848 = vadd.f32 %v784, 1.0
          %v849 = vadd.f32 %v785, 1.0
          %v850 = vadd.f32 %v786, 1.0
          %v851 = vadd.f32 %v787, 1.0
          %v852 = vadd.f32 %v788, 1.0
          %v853 = vadd.f32 %v789, 1.0
          %v854 = vadd.f32 %v790, 1.0
          %v855 = vadd.f32 %v791, 1.0
          %v856 = vadd.f32 %v792, 1.0
          %v857 = vadd.f32 %v793, 1.0
          %v858 = vadd.f32 %v794, 1.0
          %v859 = vadd.f32 %v795, 1.0
          %v860 = vadd.f32 %v796, 1.0
          %v861 = vadd.f32 %v797, 1.0
          %v862 = vadd.f32 %v798, 1.0
          %v863 = vadd.f32 %v799, 1.0
          %v864 = vadd.f32 %v800, 1.0
          %v865 = vadd.f32 %v801, 1.0
          %v866 = vadd.f32 %v802, 1.0
          %v867 = vadd.f32 %v803, 1.0
          %v868 = vadd.f32 %v804, 1.0
          %v869 = vadd.f32 %v805, 1.0
          %v870 = vadd.f32 %v806, 1.0
          %v871 = vadd.f32 %v807, 1.0
          %v872 = vadd.f32 %v808, 1.0
          %v873 = vmul.f32 %v681, %v809
          %v874 = vmul.f32 %v682, %v810
          %v875 = vmul.f32 %v683, %v811
          %v876 = vmul.f32 %v684, %v812
          %v877 = vmul.f32 %v685, %v813
          %v878 = vmul.f32 %v686, %v814
          %v879 = vmul.f32 %v687, %v815
          %v880 = vmul.f32 %v688, %v816
          %v881 = vmul.f32 %v689, %v817
          %v882 = vmul.f32 %v690, %v818
          %v883 = vmul.f32 %v691, %v819
          %v884 = vmul.f32 %v692, %v820
          %v885 = vmul.f32 %v693, %v821
          %v886 = vmul.f32 %v694, %v822
          %v887 = vmul.f32 %v695, %v823
          %v888 = vmul.f32 %v696, %v824
          %v889 = vmul.f32 %v697, %v825
          %v890 = vmul.f32 %v698, %v826
          %v891 = vmul.f32 %v699, %v827
          %v892 = vmul.f32 %v700, %v828
          %v893 = vmul.f32 %v701, %v829
          %v894 = vmul.f32 %v702, %v830
          %v895 = vmul.f32 %v703, %v831
          %v896 = vmul.f32 %v704, %v832
          %v897 = vmul.f32 %v705, %v833
          %v898 = vmul.f32 %v706, %v834
          %v899 = vmul.f32 %v707, %v835
          %v900 = vmul.f32 %v708, %v836
          %v901 = vmul.f32 %v709, %v837
          %v902 = vmul.f32 %v710, %v838
          %v903 = vmul.f32 %v711, %v839
          %v904 = vmul.f32 %v712, %v840
          %v905 = vmul.f32 %v713, %v841
          %v906 = vmul.f32 %v714, %v842
          %v907 = vmul.f32 %v715, %v843
          %v908 = vmul.f32 %v716, %v844
          %v909 = vmul.f32 %v717, %v845
          %v910 = vmul.f32 %v718, %v846
          %v911 = vmul.f32 %v719, %v847
          %v912 = vmul.f32 %v720, %v848
          %v913 = vmul.f32 %v721, %v849
          %v914 = vmul.f32 %v722, %v850
          %v915 = vmul.f32 %v723, %v851
          %v916 = vmul.f32 %v724, %v852
          %v917 = vmul.f32 %v725, %v853
          %v918 = vmul.f32 %v726, %v854
          %v919 = vmul.f32 %v727, %v855
          %v920 = vmul.f32 %v728, %v856
          %v921 = vmul.f32 %v729, %v857
          %v922 = vmul.f32 %v730, %v858
          %v923 = vmul.f32 %v731, %v859
          %v924 = vmul.f32 %v732, %v860
          %v925 = vmul.f32 %v733, %v861
          %v926 = vmul.f32 %v734, %v862
          %v927 = vmul.f32 %v735, %v863
          %v928 = vmul.f32 %v736, %v864
          %v929 = vmul.f32 %v737, %v865
          %v930 = vmul.f32 %v738, %v866
          %v931 = vmul.f32 %v739, %v867
          %v932 = vmul.f32 %v740, %v868
          %v933 = vmul.f32 %v741, %v869
          %v934 = vmul.f32 %v742, %v870
          %v935 = vmul.f32 %v743, %v871
          %v936 = vmul.f32 %v744, %v872
          %v937 = vrcp.pop %v873
          %v938 = vrcp.pop %v874
          %v939 = vrcp.pop %v875
          %v940 = vrcp.pop %v876
          %v941 = vrcp.pop %v877
          %v942 = vrcp.pop %v878
          %v943 = vrcp.pop %v879
          %v944 = vrcp.pop %v880
          %v945 = vrcp.pop %v881
          %v946 = vrcp.pop %v882
          %v947 = vrcp.pop %v883
          %v948 = vrcp.pop %v884
          %v949 = vrcp.pop %v885
          %v950 = vrcp.pop %v886
          %v951 = vrcp.pop %v887
          %v952 = vrcp.pop %v888
          %v953 = vrcp.pop %v889
          %v954 = vrcp.pop %v890
          %v955 = vrcp.pop %v891
          %v956 = vrcp.pop %v892
          %v957 = vrcp.pop %v893
          %v958 = vrcp.pop %v894
          %v959 = vrcp.pop %v895
          %v960 = vrcp.pop %v896
          %v961 = vrcp.pop %v897
          %v962 = vrcp.pop %v898
          %v963 = vrcp.pop %v899
          %v964 = vrcp.pop %v900
          %v965 = vrcp.pop %v901
          %v966 = vrcp.pop %v902
          %v967 = vrcp.pop %v903
          %v968 = vrcp.pop %v904
          %v969 = vrcp.pop %v905
          %v970 = vrcp.pop %v906
          %v971 = vrcp.pop %v907
          %v972 = vrcp.pop %v908
          %v973 = vrcp.pop %v909
          %v974 = vrcp.pop %v910
          %v975 = vrcp.pop %v911
          %v976 = vrcp.pop %v912
          %v977 = vrcp.pop %v913
          %v978 = vrcp.pop %v914
          %v979 = vrcp.pop %v915
          %v980 = vrcp.pop %v916
          %v981 = vrcp.pop %v917
          %v982 = vrcp.pop %v918
          %v983 = vrcp.pop %v919
          %v984 = vrcp.pop %v920
          %v985 = vrcp.pop %v921
          %v986 = vrcp.pop %v922
          %v987 = vrcp.pop %v923
          %v988 = vrcp.pop %v924
          %v989 = vrcp.pop %v925
          %v990 = vrcp.pop %v926
          %v991 = vrcp.pop %v927
          %v992 = vrcp.pop %v928
          %v993 = vrcp.pop %v929
          %v994 = vrcp.pop %v930
          %v995 = vrcp.pop %v931
          %v996 = vrcp.pop %v932
          %v997 = vrcp.pop %v933
          %v998 = vrcp.pop %v934
          %v999 = vrcp.pop %v935
          %v1000 = vrcp.pop %v936
          %v1001 = vmul.f32 %v873, %v937
          %v1002 = vmul.f32 %v874, %v938
          %v1003 = vmul.f32 %v875, %v939
          %v1004 = vmul.f32 %v876, %v940
          %v1005 = vmul.f32 %v877, %v941
          %v1006 = vmul.f32 %v878, %v942
          %v1007 = vmul.f32 %v879, %v943
          %v1008 = vmul.f32 %v880, %v944
          %v1009 = vmul.f32 %v881, %v945
          %v1010 = vmul.f32 %v882, %v946
          %v1011 = vmul.f32 %v883, %v947
          %v1012 = vmul.f32 %v884, %v948
          %v1013 = vmul.f32 %v885, %v949
          %v1014 = vmul.f32 %v886, %v950
          %v1015 = vmul.f32 %v887, %v951
          %v1016 = vmul.f32 %v888, %v952
          %v1017 = vmul.f32 %v889, %v953
          %v1018 = vmul.f32 %v890, %v954
          %v1019 = vmul.f32 %v891, %v955
          %v1020 = vmul.f32 %v892, %v956
          %v1021 = vmul.f32 %v893, %v957
          %v1022 = vmul.f32 %v894, %v958
          %v1023 = vmul.f32 %v895, %v959
          %v1024 = vmul.f32 %v896, %v960
          %v1025 = vmul.f32 %v897, %v961
          %v1026 = vmul.f32 %v898, %v962
          %v1027 = vmul.f32 %v899, %v963
          %v1028 = vmul.f32 %v900, %v964
          %v1029 = vmul.f32 %v901, %v965
          %v1030 = vmul.f32 %v902, %v966
          %v1031 = vmul.f32 %v903, %v967
          %v1032 = vmul.f32 %v904, %v968
          %v1033 = vmul.f32 %v905, %v969
          %v1034 = vmul.f32 %v906, %v970
          %v1035 = vmul.f32 %v907, %v971
          %v1036 = vmul.f32 %v908, %v972
          %v1037 = vmul.f32 %v909, %v973
          %v1038 = vmul.f32 %v910, %v974
          %v1039 = vmul.f32 %v911, %v975
          %v1040 = vmul.f32 %v912, %v976
          %v1041 = vmul.f32 %v913, %v977
          %v1042 = vmul.f32 %v914, %v978
          %v1043 = vmul.f32 %v915, %v979
          %v1044 = vmul.f32 %v916, %v980
          %v1045 = vmul.f32 %v917, %v981
          %v1046 = vmul.f32 %v918, %v982
          %v1047 = vmul.f32 %v919, %v983
          %v1048 = vmul.f32 %v920, %v984
          %v1049 = vmul.f32 %v921, %v985
          %v1050 = vmul.f32 %v922, %v986
          %v1051 = vmul.f32 %v923, %v987
          %v1052 = vmul.f32 %v924, %v988
          %v1053 = vmul.f32 %v925, %v989
          %v1054 = vmul.f32 %v926, %v990
          %v1055 = vmul.f32 %v927, %v991
          %v1056 = vmul.f32 %v928, %v992
          %v1057 = vmul.f32 %v929, %v993
          %v1058 = vmul.f32 %v930, %v994
          %v1059 = vmul.f32 %v931, %v995
          %v1060 = vmul.f32 %v932, %v996
          %v1061 = vmul.f32 %v933, %v997
          %v1062 = vmul.f32 %v934, %v998
          %v1063 = vmul.f32 %v935, %v999
          %v1064 = vmul.f32 %v936, %v1000
          %v1065 = vsub.f32 2.0, %v1001
          %v1066 = vsub.f32 2.0, %v1002
          %v1067 = vsub.f32 2.0, %v1003
          %v1068 = vsub.f32 2.0, %v1004
          %v1069 = vsub.f32 2.0, %v1005
          %v1070 = vsub.f32 2.0, %v1006
          %v1071 = vsub.f32 2.0, %v1007
          %v1072 = vsub.f32 2.0, %v1008
          %v1073 = vsub.f32 2.0, %v1009
          %v1074 = vsub.f32 2.0, %v1010
          %v1075 = vsub.f32 2.0, %v1011
          %v1076 = vsub.f32 2.0, %v1012
          %v1077 = vsub.f32 2.0, %v1013
          %v1078 = vsub.f32 2.0, %v1014
          %v1079 = vsub.f32 2.0, %v1015
          %v1080 = vsub.f32 2.0, %v1016
          %v1081 = vsub.f32 2.0, %v1017
          %v1082 = vsub.f32 2.0, %v1018
          %v1083 = vsub.f32 2.0, %v1019
          %v1084 = vsub.f32 2.0, %v1020
          %v1085 = vsub.f32 2.0, %v1021
          %v1086 = vsub.f32 2.0, %v1022
          %v1087 = vsub.f32 2.0, %v1023
          %v1088 = vsub.f32 2.0, %v1024
          %v1089 = vsub.f32 2.0, %v1025
          %v1090 = vsub.f32 2.0, %v1026
          %v1091 = vsub.f32 2.0, %v1027
          %v1092 = vsub.f32 2.0, %v1028
          %v1093 = vsub.f32 2.0, %v1029
          %v1094 = vsub.f32 2.0, %v1030
          %v1095 = vsub.f32 2.0, %v1031
          %v1096 = vsub.f32 2.0, %v1032
          %v1097 = vsub.f32 2.0, %v1033
          %v1098 = vsub.f32 2.0, %v1034
          %v1099 = vsub.f32 2.0, %v1035
          %v1100 = vsub.f32 2.0, %v1036
          %v1101 = vsub.f32 2.0, %v1037
          %v1102 = vsub.f32 2.0, %v1038
          %v1103 = vsub.f32 2.0, %v1039
          %v1104 = vsub.f32 2.0, %v1040
          %v1105 = vsub.f32 2.0, %v1041
          %v1106 = vsub.f32 2.0, %v1042
          %v1107 = vsub.f32 2.0, %v1043
          %v1108 = vsub.f32 2.0, %v1044
          %v1109 = vsub.f32 2.0, %v1045
          %v1110 = vsub.f32 2.0, %v1046
          %v1111 = vsub.f32 2.0, %v1047
          %v1112 = vsub.f32 2.0, %v1048
          %v1113 = vsub.f32 2.0, %v1049
          %v1114 = vsub.f32 2.0, %v1050
          %v1115 = vsub.f32 2.0, %v1051
          %v1116 = vsub.f32 2.0, %v1052
          %v1117 = vsub.f32 2.0, %v1053
          %v1118 = vsub.f32 2.0, %v1054
          %v1119 = vsub.f32 2.0, %v1055
          %v1120 = vsub.f32 2.0, %v1056
          %v1121 = vsub.f32 2.0, %v1057
          %v1122 = vsub.f32 2.0, %v1058
          %v1123 = vsub.f32 2.0, %v1059
          %v1124 = vsub.f32 2.0, %v1060
          %v1125 = vsub.f32 2.0, %v1061
          %v1126 = vsub.f32 2.0, %v1062
          %v1127 = vsub.f32 2.0, %v1063
          %v1128 = vsub.f32 2.0, %v1064
          %v1129 = vmul.f32 %v937, %v1065
          %v1130 = vmul.f32 %v938, %v1066
          %v1131 = vmul.f32 %v939, %v1067
          %v1132 = vmul.f32 %v940, %v1068
          %v1133 = vmul.f32 %v941, %v1069
          %v1134 = vmul.f32 %v942, %v1070
          %v1135 = vmul.f32 %v943, %v1071
          %v1136 = vmul.f32 %v944, %v1072
          %v1137 = vmul.f32 %v945, %v1073
          %v1138 = vmul.f32 %v946, %v1074
          %v1139 = vmul.f32 %v947, %v1075
          %v1140 = vmul.f32 %v948, %v1076
          %v1141 = vmul.f32 %v949, %v1077
          %v1142 = vmul.f32 %v950, %v1078
          %v1143 = vmul.f32 %v951, %v1079
          %v1144 = vmul.f32 %v952, %v1080
          %v1145 = vmul.f32 %v953, %v1081
          %v1146 = vmul.f32 %v954, %v1082
          %v1147 = vmul.f32 %v955, %v1083
          %v1148 = vmul.f32 %v956, %v1084
          %v1149 = vmul.f32 %v957, %v1085
          %v1150 = vmul.f32 %v958, %v1086
          %v1151 = vmul.f32 %v959, %v1087
          %v1152 = vmul.f32 %v960, %v1088
          %v1153 = vmul.f32 %v961, %v1089
          %v1154 = vmul.f32 %v962, %v1090
          %v1155 = vmul.f32 %v963, %v1091
          %v1156 = vmul.f32 %v964, %v1092
          %v1157 = vmul.f32 %v965, %v1093
          %v1158 = vmul.f32 %v966, %v1094
          %v1159 = vmul.f32 %v967, %v1095
          %v1160 = vmul.f32 %v968, %v1096
          %v1161 = vmul.f32 %v969, %v1097
          %v1162 = vmul.f32 %v970, %v1098
          %v1163 = vmul.f32 %v971, %v1099
          %v1164 = vmul.f32 %v972, %v1100
          %v1165 = vmul.f32 %v973, %v1101
          %v1166 = vmul.f32 %v974, %v1102
          %v1167 = vmul.f32 %v975, %v1103
          %v1168 = vmul.f32 %v976, %v1104
          %v1169 = vmul.f32 %v977, %v1105
          %v1170 = vmul.f32 %v978, %v1106
          %v1171 = vmul.f32 %v979, %v1107
          %v1172 = vmul.f32 %v980, %v1108
          %v1173 = vmul.f32 %v981, %v1109
          %v1174 = vmul.f32 %v982, %v1110
          %v1175 = vmul.f32 %v983, %v1111
          %v1176 = vmul.f32 %v984, %v1112
          %v1177 = vmul.f32 %v985, %v1113
          %v1178 = vmul.f32 %v986, %v1114
          %v1179 = vmul.f32 %v987, %v1115
          %v1180 = vmul.f32 %v988, %v1116
          %v1181 = vmul.f32 %v989, %v1117
          %v1182 = vmul.f32 %v990, %v1118
          %v1183 = vmul.f32 %v991, %v1119
          %v1184 = vmul.f32 %v992, %v1120
          %v1185 = vmul.f32 %v993, %v1121
          %v1186 = vmul.f32 %v994, %v1122
          %v1187 = vmul.f32 %v995, %v1123
          %v1188 = vmul.f32 %v996, %v1124
          %v1189 = vmul.f32 %v997, %v1125
          %v1190 = vmul.f32 %v998, %v1126
          %v1191 = vmul.f32 %v999, %v1127
          %v1192 = vmul.f32 %v1000, %v1128
          %v1193 = vmul.f32 %v554, %v1129
          %v1194 = vmul.f32 %v556, %v1130
          %v1195 = vmul.f32 %v558, %v1131
          %v1196 = vmul.f32 %v560, %v1132
          %v1197 = vmul.f32 %v562, %v1133
          %v1198 = vmul.f32 %v564, %v1134
          %v1199 = vmul.f32 %v566, %v1135
          %v1200 = vmul.f32 %v568, %v1136
          %v1201 = vmul.f32 %v570, %v1137
          %v1202 = vmul.f32 %v572, %v1138
          %v1203 = vmul.f32 %v574, %v1139
          %v1204 = vmul.f32 %v576, %v1140
          %v1205 = vmul.f32 %v578, %v1141
          %v1206 = vmul.f32 %v580, %v1142
          %v1207 = vmul.f32 %v582, %v1143
          %v1208 = vmul.f32 %v584, %v1144
          %v1209 = vmul.f32 %v586, %v1145
          %v1210 = vmul.f32 %v588, %v1146
          %v1211 = vmul.f32 %v590, %v1147
          %v1212 = vmul.f32 %v592, %v1148
          %v1213 = vmul.f32 %v594, %v1149
          %v1214 = vmul.f32 %v596, %v1150
          %v1215 = vmul.f32 %v598, %v1151
          %v1216 = vmul.f32 %v600, %v1152
          %v1217 = vmul.f32 %v602, %v1153
          %v1218 = vmul.f32 %v604, %v1154
          %v1219 = vmul.f32 %v606, %v1155
          %v1220 = vmul.f32 %v608, %v1156
          %v1221 = vmul.f32 %v610, %v1157
          %v1222 = vmul.f32 %v612, %v1158
          %v1223 = vmul.f32 %v614, %v1159
          %v1224 = vmul.f32 %v616, %v1160
          %v1225 = vmul.f32 %v618, %v1161
          %v1226 = vmul.f32 %v620, %v1162
          %v1227 = vmul.f32 %v622, %v1163
          %v1228 = vmul.f32 %v624, %v1164
          %v1229 = vmul.f32 %v626, %v1165
          %v1230 = vmul.f32 %v628, %v1166
          %v1231 = vmul.f32 %v630, %v1167
          %v1232 = vmul.f32 %v632, %v1168
          %v1233 = vmul.f32 %v634, %v1169
          %v1234 = vmul.f32 %v636, %v1170
          %v1235 = vmul.f32 %v638, %v1171
          %v1236 = vmul.f32 %v640, %v1172
          %v1237 = vmul.f32 %v642, %v1173
          %v1238 = vmul.f32 %v644, %v1174
          %v1239 = vmul.f32 %v646, %v1175
          %v1240 = vmul.f32 %v648, %v1176
          %v1241 = vmul.f32 %v650, %v1177
          %v1242 = vmul.f32 %v652, %v1178
          %v1243 = vmul.f32 %v654, %v1179
          %v1244 = vmul.f32 %v656, %v1180
          %v1245 = vmul.f32 %v658, %v1181
          %v1246 = vmul.f32 %v660, %v1182
          %v1247 = vmul.f32 %v662, %v1183
          %v1248 = vmul.f32 %v664, %v1184
          %v1249 = vmul.f32 %v666, %v1185
          %v1250 = vmul.f32 %v668, %v1186
          %v1251 = vmul.f32 %v670, %v1187
          %v1252 = vmul.f32 %v672, %v1188
          %v1253 = vmul.f32 %v674, %v1189
          %v1254 = vmul.f32 %v676, %v1190
          %v1255 = vmul.f32 %v678, %v1191
          %v1256 = vmul.f32 %v680, %v1192
          %v1257 = vadd.f32 %v1193, %v1195
          %v1258 = vadd.f32 %v1257, %v1197
          %v1259 = vadd.f32 %v1258, %v1199
          %v1260 = vadd.f32 %v1259, %v1201
          %v1261 = vadd.f32 %v1260, %v1203
          %v1262 = vadd.f32 %v1261, %v1205
          %v1263 = vadd.f32 %v1262, %v1207
          %v1264 = vadd.f32 %v1263, %v1209
          %v1265 = vadd.f32 %v1264, %v1211
          %v1266 = vadd.f32 %v1265, %v1213
          %v1267 = vadd.f32 %v1266, %v1215
          %v1268 = vadd.f32 %v1267, %v1217
          %v1269 = vadd.f32 %v1268, %v1219
          %v1270 = vadd.f32 %v1269, %v1221
          %v1271 = vadd.f32 %v1270, %v1223
          %v1272 = vadd.f32 %v1271, %v1225
          %v1273 = vadd.f32 %v1272, %v1227
          %v1274 = vadd.f32 %v1273, %v1229
          %v1275 = vadd.f32 %v1274, %v1231
          %v1276 = vadd.f32 %v1275, %v1233
          %v1277 = vadd.f32 %v1276, %v1235
          %v1278 = vadd.f32 %v1277, %v1237
          %v1279 = vadd.f32 %v1278, %v1239
          %v1280 = vadd.f32 %v1279, %v1241
          %v1281 = vadd.f32 %v1280, %v1243
          %v1282 = vadd.f32 %v1281, %v1245
          %v1283 = vadd.f32 %v1282, %v1247
          %v1284 = vadd.f32 %v1283, %v1249
          %v1285 = vadd.f32 %v1284, %v1251
          %v1286 = vadd.f32 %v1285, %v1253
          %v1287 = vadd.f32 %v1286, %v1255
          %v1288 = vrot.slane %v1287, 4
          %v1289 = vadd.f32 %v1287, %v1288
          %v1290 = vrot.slane %v1289, 2
          %v1291 = vadd.f32 %v1289, %v1290
          %v1292 = vrot.slane %v1291, 1
          %v1293 = vadd.f32 %v1291, %v1292
          %v1294 = vadd.f32 %v1194, %v1196
          %v1295 = vadd.f32 %v1294, %v1198
          %v1296 = vadd.f32 %v1295, %v1200
          %v1297 = vadd.f32 %v1296, %v1202
          %v1298 = vadd.f32 %v1297, %v1204
          %v1299 = vadd.f32 %v1298, %v1206
          %v1300 = vadd.f32 %v1299, %v1208
          %v1301 = vadd.f32 %v1300, %v1210
          %v1302 = vadd.f32 %v1301, %v1212
          %v1303 = vadd.f32 %v1302, %v1214
          %v1304 = vadd.f32 %v1303, %v1216
          %v1305 = vadd.f32 %v1304, %v1218
          %v1306 = vadd.f32 %v1305, %v1220
          %v1307 = vadd.f32 %v1306, %v1222
          %v1308 = vadd.f32 %v1307, %v1224
          %v1309 = vadd.f32 %v1308, %v1226
          %v1310 = vadd.f32 %v1309, %v1228
          %v1311 = vadd.f32 %v1310, %v1230
          %v1312 = vadd.f32 %v1311, %v1232
          %v1313 = vadd.f32 %v1312, %v1234
          %v1314 = vadd.f32 %v1313, %v1236
          %v1315 = vadd.f32 %v1314, %v1238
          %v1316 = vadd.f32 %v1315, %v1240
          %v1317 = vadd.f32 %v1316, %v1242
          %v1318 = vadd.f32 %v1317, %v1244
          %v1319 = vadd.f32 %v1318, %v1246
          %v1320 = vadd.f32 %v1319, %v1248
          %v1321 = vadd.f32 %v1320, %v1250
          %v1322 = vadd.f32 %v1321, %v1252
          %v1323 = vadd.f32 %v1322, %v1254
          %v1324 = vadd.f32 %v1323, %v1256
          %v1325 = vrot.slane %v1324, 4
          %v1326 = vadd.f32 %v1324, %v1325
          %v1327 = vrot.slane %v1326, 2
          %v1328 = vadd.f32 %v1326, %v1327
          %v1329 = vrot.slane %v1328, 1
          %v1330 = vadd.f32 %v1328, %v1329
          %v1331 = vadd.f32 %v1293, %v1330
          %1332 = vadd.xlane.f32.xlu0 %v1331
          %v1333 = vpop.xlane.xlu0 %1332
          %v1334 = vrcp.pop %v1333
          %v1335 = vmul.f32 %v1333, %v1334
          %v1336 = vsub.f32 2.0, %v1335
          %v1337 = vmul.f32 %v1334, %v1336
          %v1338 = vmul.f32 %v1293, %v1337
          %v1339 = vmul.f32 %v1330, %v1337
          %v1342 = vcombine.low %v1338, %v1339
          %v1344 = vunpack.c.l.s4 1966171168
          %v1345 = vunpack.c.0.s8 %v1344
          %v1346 = vlaneseq
          %v1347 = vshrl.u32 %v1346, 7
          %v1348 = vsub.s32 %v1345, %v1347
          %v1349 = vrot.slane %v1342, %v1348
          %v1351 = vunpack.c.l.s4 1966171168
          %v1352 = vunpack.c.0.s8 %v1351
          %v1353 = vlaneseq
          %v1354 = vshrl.u32 %v1353, 7
          %v1355 = vsub.s32 %v1352, %v1354
          %v1356 = vrot.slane %v1349, %v1355
          %v1358 = vlaneseq
          %vm1359 = vcmp.ge.s32.totalorder %v1358, 0
          %vm1360 = vcmp.lt.s32.totalorder %v1358, 256
          %vm1361 = vmand %vm1359, %vm1360
          %s1362 = sshra.s32 %s130, 3
          %s1363 = sand.u32 %s130, 7
          %s1364 = sshra.s32 %s130, 3
          %s1365 = sand.u32 %s130, 7
          %s1366 = smul.u32 %s1362, 2
          %s1367 = smul.u32 %s1366, 8
          %s1368 = sadd.s32 %s1367, %s1365
          %s1369 = scalar_lea.vmem %s112, %s1368 [#allocation2]
          %1370 = vst.msk [vmem:[%s1369] ss:$8 sm:$0x3] %vm1361, %v1356
          %1371 = vst.msk [vmem:[%s1369] ss:$8 sm:$0x0] %vm1361, %v1356
        $region29: #{tpu_custom_call.1} parent=23 // loop_footer
          %s134 = sadd.s32 1, %s130
        $region30: #{tpu_custom_call.1} parent=23 // loop_footer_branch
          %129 = sbr.rel target = $region26
        $region31: #{tpu_custom_call.1} parent=23 // loop_exit
          _
        %s1372 = sand.u32 %s49, 1
        %s1373 = scalar_lea.sflag [#allocation3], %s1372
        %s1374 = sand.u32 %s49, 1
        %s1375 = smul.addr %s1374, 16
        %s1376 = scalar_lea.vmem [#allocation2], %s1375
        // Predicated region
        $region32: #{tpu_custom_call.1} parent=23 // pred_check
          %p1377 = pneg %p59
        $region33: #{tpu_custom_call.1} parent=23 // pred_check_branch
          %1379 = sbr.rel (%p1377) target = $region35
        $region34: #{tpu_custom_call.1} parent=23 // pred_region
          %s1381 = ssub.s32 256, 256
          %1382 = vsyncadd %s1373, %s1381
          %s1383 = smul.addr %s15, 2
          %s1384 = smul.addr %s1383, 128
          %s1385 = scalar_lea.hbm %s1, %s1384
          %s1387 = sshll.u32 %s1376, 4
          %s1388 = int_to_ptr.vmem [resolvable:$true] %s1387
          %1390 = dma.vmem_to_hbm [thread:$0]  %s1388, 256, %s1385, %s1373
        $region35: #{tpu_custom_call.1} parent=23 // pred_fallthru
          _
      $region24: #{tpu_custom_call.1} parent=5 // pred_fallthru
        _
      %p1391 = scmp.le.s32.totalorder 2, %s10
      // Predicated region
      $region36: #{tpu_custom_call.1} parent=5 // pred_check
        %p1392 = pneg %p1391
      $region37: #{tpu_custom_call.1} parent=5 // pred_check_branch
        %1394 = sbr.rel (%p1392) target = $region39
      $region38: #{tpu_custom_call.1} parent=5 // pred_region
        %s1395 = ssub.s32 %s10, 2
        // Predicated region
        $region40: #{tpu_custom_call.1} parent=38 // pred_check
          %p1396 = pneg %p65
        $region41: #{tpu_custom_call.1} parent=38 // pred_check_branch
          %1398 = sbr.rel (%p1396) target = $region43
        $region42: #{tpu_custom_call.1} parent=38 // pred_region
          %s1399 = sand.u32 %s50, 1
          %s1400 = scalar_lea.sflag [#allocation3], %s1399
          %s1401 = sand.u32 %s50, 1
          %s1402 = smul.addr %s1401, 16
          %s1403 = scalar_lea.vmem [#allocation2], %s1402
          %1404 = dma.done %s1400, 256
        $region43: #{tpu_custom_call.1} parent=38 // pred_fallthru
          _
      $region39: #{tpu_custom_call.1} parent=5 // pred_fallthru
        _
    $region6: #{tpu_custom_call.1} parent=1 // loop_footer
      %s14 = sadd.s32 1, %s10
    $region7: #{tpu_custom_call.1} parent=1 // loop_footer_branch
      %9 = sbr.rel target = $region3
    $region8: #{tpu_custom_call.1} parent=1 // loop_exit
      _
    %1405 = vsyncpa [#allocation3], 1
    %s1406 = scalar_lea.sflag [#allocation3], 1
    %1407 = vsyncpa %s1406, 1

</llo_original>
